<compile_context>
chip_gen: v7x
topology: tpu7x:2x2x1
jax: 0.10.0
libtpu: 0.0.40
codegen_flags: <defaults>
</compile_context>

<pallas_src>
import jax
import jax.numpy as jnp
from jax import lax
from jax.experimental import pallas as pl
from jax.experimental.pallas import tpu as pltpu


# --------------------------------------------------------------------------
# tiling plan
# --------------------------------------------------------------------------
_TD_CAP = 2048          # lane tile cap   (256*2048*4B = 2 MiB per input block)
_TB_CAP = 256           # sublane tile cap


def _round_up(x, m):
    return (x + m - 1) // m * m


def _largest_divisor_tile(n, unit, cap):
    """Largest multiple of `unit` that divides `n` and is <= cap (n % unit == 0)."""
    t = max(min(cap, n) // unit * unit, unit)
    while t > unit and n % t:
        t -= unit
    return t


def _plan(B, D):
    """Return (B_pad, D_pad, TB, TD) with minimal padding and divisor tiles."""
    # ---- lane (feature) axis ----
    if D % 128 == 0:
        D_pad, TD = D, _largest_divisor_tile(D, 128, _TD_CAP)
    elif D <= _TD_CAP:
        D_pad, TD = D, D                     # single ragged block == full dim
    else:
        # TODO(synk): mask the 128-tail in-kernel to avoid this jnp.pad copy.
        D_pad = _round_up(D, 128)
        TD = _largest_divisor_tile(D_pad, 128, _TD_CAP)
    # ---- sublane (batch) axis: aim for >= 2 tiles so v7x megacore splits ----
    if B % 8 == 0:
        cap = _TB_CAP if B < 16 else min(_TB_CAP, B // 2)
        B_pad, TB = B, _largest_divisor_tile(B, 8, max(cap, 8))
    elif B <= _TB_CAP:
        B_pad, TB = B, B                     # single ragged block == full dim
    else:
        # TODO(synk): mask the 8-tail in-kernel to avoid this jnp.pad copy.
        B_pad = _round_up(B, 8)
        cap = min(_TB_CAP, B_pad // 2)
        TB = _largest_divisor_tile(B_pad, 8, max(cap, 8))
    return B_pad, D_pad, TB, TD


def _maybe_pad(x, B_pad, D_pad):
    B, D = x.shape
    if (B, D) == (B_pad, D_pad):
        return x                              # common case: zero extra HBM traffic
    return jnp.pad(x, ((0, B_pad - B), (0, D_pad - D)))


def _input_spec(TB, TD, deep_pipeline):
    index_map = lambda i, k: (i, k)
    if deep_pipeline:
        try:
            return pl.BlockSpec((TB, TD), index_map,
                                pipeline_mode=pl.Buffered(3))
        except (TypeError, AttributeError):   # API without pipeline_mode
            pass
    return pl.BlockSpec((TB, TD), index_map)


# --------------------------------------------------------------------------
# kernels
# --------------------------------------------------------------------------
def _contrastive_kernel(a_ref, p_ref, lbl_ref, margin_ref, out_ref, acc_ref):
    k = pl.program_id(1)

    @pl.when(k == 0)
    def _():
        acc_ref[...] = jnp.zeros_like(acc_ref)

    a = a_ref[...].astype(jnp.float32)                       # (TB, TD)
    p = p_ref[...].astype(jnp.float32)
    TD = a.shape[1]
    n_full = TD // 128
    rem = TD - n_full * 128

    if n_full:
        acc = acc_ref[...]                                    # (TB, 128)
        for c in range(n_full):                               # pure VPU adds
            d = a[:, c * 128:(c + 1) * 128] - p[:, c * 128:(c + 1) * 128]
            acc = acc + d * d
        acc_ref[...] = acc
    if rem:                                                   # ragged (<128) tail
        d = a[:, n_full * 128:] - p[:, n_full * 128:]
        acc_ref[:, :1] += jnp.sum(d * d, axis=1, keepdims=True)

    @pl.when(k == pl.num_programs(1) - 1)
    def _():
        sq = jnp.sum(acc_ref[...], axis=1, keepdims=True)     # (TB, 1) XLU reduce
        dist = jnp.sqrt(sq)                                   # torch.norm(dim=1)
        lbl = lbl_ref[...].astype(jnp.float32)                # (TB, 1)
        margin = margin_ref[0]
        losses = lbl * dist + (1.0 - lbl) * jnp.maximum(margin - dist, 0.0)
        # lane-dense (1,8,128) block -> unmasked store; wrapper sums [:,0,0]
        out_ref[...] = jnp.full(out_ref.shape, jnp.sum(losses), jnp.float32)


def _cosine_kernel(a_ref, p_ref, eps_ref, out_ref, dot_acc, na_acc, nb_acc):
    k = pl.program_id(1)

    @pl.when(k == 0)
    def _():
        dot_acc[...] = jnp.zeros_like(dot_acc)
        na_acc[...] = jnp.zeros_like(na_acc)
        nb_acc[...] = jnp.zeros_like(nb_acc)

    a = a_ref[...].astype(jnp.float32)
    p = p_ref[...].astype(jnp.float32)
    TD = a.shape[1]
    n_full = TD // 128
    rem = TD - n_full * 128

    if n_full:
        acc_d, acc_a, acc_p = dot_acc[...], na_acc[...], nb_acc[...]
        for c in range(n_full):
            ac = a[:, c * 128:(c + 1) * 128]
            pc = p[:, c * 128:(c + 1) * 128]
            acc_d = acc_d + ac * pc
            acc_a = acc_a + ac * ac
            acc_p = acc_p + pc * pc
        dot_acc[...], na_acc[...], nb_acc[...] = acc_d, acc_a, acc_p
    if rem:
        ac = a[:, n_full * 128:]
        pc = p[:, n_full * 128:]
        dot_acc[:, :1] += jnp.sum(ac * pc, axis=1, keepdims=True)
        na_acc[:, :1] += jnp.sum(ac * ac, axis=1, keepdims=True)
        nb_acc[:, :1] += jnp.sum(pc * pc, axis=1, keepdims=True)

    @pl.when(k == pl.num_programs(1) - 1)
    def _():
        dots = jnp.sum(dot_acc[...], axis=1, keepdims=True)
        na = jnp.sum(na_acc[...], axis=1, keepdims=True)
        nb = jnp.sum(nb_acc[...], axis=1, keepdims=True)
        eps = eps_ref[0]
        # cos = dot * rsqrt(max(|a|^2 |p|^2, eps^2)) — EUP rsqrt; matches
        # F.cosine_similarity's clamp-the-product semantics.
        cos = dots * lax.rsqrt(jnp.maximum(na * nb, eps * eps))
        out_ref[...] = jnp.full(out_ref.shape, jnp.sum(cos), jnp.float32)


# --------------------------------------------------------------------------
# wrapper (= ContrastiveLoss.forward)
# --------------------------------------------------------------------------
def contrastive_loss(anchor, positive, labels=None, *, margin=0.5,
                     loss_type="contrastive", eps=1e-8):
    anchor = jnp.asarray(anchor)
    positive = jnp.asarray(positive)
    B, D = anchor.shape
    B_pad, D_pad, TB, TD = _plan(B, D)
    nb, nd = B_pad // TB, D_pad // TD

    a = _maybe_pad(anchor, B_pad, D_pad)
    p = _maybe_pad(positive, B_pad, D_pad)

    # deeper buffering only when the reduction grid is deep and steps are short
    deep = nd >= 3 and (TB * TD * 4) <= (1 << 20)
    ab_spec = _input_spec(TB, TD, deep)
    smem_spec = pl.BlockSpec(memory_space=pltpu.MemorySpace.SMEM)
    out_spec = pl.BlockSpec((1, 8, 128), lambda i, k: (i, 0, 0))
    out_shape = jax.ShapeDtypeStruct((nb, 8, 128), jnp.float32)
    compiler_params = pltpu.CompilerParams(
        dimension_semantics=("parallel", "arbitrary"))
    io_bytes = 2 * B_pad * D_pad * anchor.dtype.itemsize + nb * 8 * 128 * 4

    if loss_type == "contrastive":
        if labels is None:
            raise ValueError("labels are required for loss_type='contrastive'")
        lbl = jnp.asarray(labels, jnp.float32).reshape(B)
        if B_pad != B:
            # padded rows: label=1.0, zero features -> dist=0 -> 0 contribution
            lbl = jnp.pad(lbl, (0, B_pad - B), constant_values=1.0)
        lbl = lbl.reshape(B_pad, 1)
        out = pl.pallas_call(
            _contrastive_kernel,
            out_shape=out_shape,
            grid_spec=pltpu.PrefetchScalarGridSpec(
                num_scalar_prefetch=0,
                grid=(nb, nd),
                in_specs=[ab_spec, ab_spec,
                          pl.BlockSpec((TB, 1), lambda i, k: (i, 0)),
                          smem_spec],
                out_specs=out_spec,
                scratch_shapes=[pltpu.VMEM((TB, 128), jnp.float32)]),
            compiler_params=compiler_params,
            cost_estimate=pl.CostEstimate(
                flops=int(3 * B_pad * D_pad + 6 * B_pad),
                transcendentals=int(B_pad),
                bytes_accessed=int(io_bytes + B_pad * 4)),
        )(a, p, lbl, jnp.full((1,), margin, jnp.float32))
        return jnp.sum(out[:, 0, 0]) / B           # mean over the true batch

    elif loss_type == "cosine":
        out = pl.pallas_call(
            _cosine_kernel,
            out_shape=out_shape,
            grid_spec=pltpu.PrefetchScalarGridSpec(
                num_scalar_prefetch=0,
                grid=(nb, nd),
                in_specs=[ab_spec, ab_spec, smem_spec],
                out_specs=out_spec,
                scratch_shapes=[pltpu.VMEM((TB, 128), jnp.float32),
                                pltpu.VMEM((TB, 128), jnp.float32),
                                pltpu.VMEM((TB, 128), jnp.float32)]),
            compiler_params=compiler_params,
            cost_estimate=pl.CostEstimate(
                flops=int(6 * B_pad * D_pad + 8 * B_pad),
                transcendentals=int(B_pad),
                bytes_accessed=int(io_bytes)),
        )(a, p, jnp.full((1,), eps, jnp.float32))
        return -(jnp.sum(out[:, 0, 0]) / B)        # -mean(cos_sim)

    raise ValueError(f"unknown loss_type: {loss_type}")


# --------------------------------------------------------------------------
# pure-JAX reference (matches the PyTorch module)
# --------------------------------------------------------------------------
def _reference(anchor, positive, labels=None, margin=0.5,
               loss_type="contrastive", eps=1e-8):
    if loss_type == "contrastive":
        d = jnp.sqrt(jnp.sum((anchor - positive) ** 2, axis=1))
        losses = labels * d + (1 - labels) * jnp.maximum(margin - d, 0.0)
        return losses.mean()
    dot = jnp.sum(anchor * positive, axis=1)
    na = jnp.linalg.norm(anchor, axis=1)
    nb = jnp.linalg.norm(positive, axis=1)
    return -(dot / jnp.maximum(na * nb, eps)).mean()


if __name__ == "__main__":
    key = jax.random.PRNGKey(0)
    k1, k2, k3, k4, k5, k6, k7, k8 = jax.random.split(key, 8)

    def check(a, p, lbl, *, atol, rtol):
        got = jax.block_until_ready(
            contrastive_loss(a, p, lbl, margin=0.5, loss_type="contrastive"))
        want = _reference(a, p, lbl, 0.5, "contrastive")
        assert jnp.allclose(got, want, atol=atol, rtol=rtol), ("contrastive", got, want)
        got_c = jax.block_until_ready(contrastive_loss(a, p, loss_type="cosine"))
        want_c = _reference(a, p, None, 0.5, "cosine")
        assert jnp.allclose(got_c, want_c, atol=atol, rtol=rtol), ("cosine", got_c, want_c)

    # 1) Module's example shapes: anchor/positive (4, 512), labels (4,)
    B, D = 4, 512
    a = jax.random.normal(k1, (B, D), jnp.float32)
    p = jax.random.normal(k2, (B, D), jnp.float32)
    lbl = jnp.array([1.0, 1.0, 0.0, 0.0], jnp.float32)
    check(a, p, lbl, atol=1e-5, rtol=1e-5)

    # 2) Ragged B + 128-aligned D with a divisor tile: (37, 2304) -> TB=37,
    #    TD=1152, grid (1, 2), no padding / no jnp.pad copy.
    B, D = 37, 2304
    a = jax.random.normal(k3, (B, D), jnp.float32)
    p = jax.random.normal(k4, (B, D), jnp.float32)
    lbl = (jax.random.uniform(k5, (B,)) > 0.5).astype(jnp.float32)
    check(a, p, lbl, atol=1e-4, rtol=1e-4)

    # 3) Deep reduction grid + batch split for megacore: (64, 8192) -> TB=32,
    #    TD=2048, grid (2, 4), Buffered(3) input pipeline.
    B, D = 64, 8192
    a = jax.random.normal(k6, (B, D), jnp.float32)
    p = jax.random.normal(k7, (B, D), jnp.float32)
    lbl = (jax.random.uniform(k8, (B,)) > 0.5).astype(jnp.float32)
    check(a, p, lbl, atol=1e-4, rtol=1e-4)

    # 4) Fully ragged tiny shape exercising the sub-128 lane tail: (5, 200).
    B, D = 5, 200
    a = jax.random.normal(k1, (B, D), jnp.float32)
    p = jax.random.normal(k2, (B, D), jnp.float32)
    lbl = jnp.array([1.0, 0.0, 1.0, 0.0, 1.0], jnp.float32)
    check(a, p, lbl, atol=1e-5, rtol=1e-5)

    print("KERNEL_OK")
</pallas_src>

<mosaic_0001>
module attributes {stable_mosaic.version = 11 : i64} {
  func.func @_contrastive_kernel(%arg0: i32, %arg1: i32, %arg2: memref<4x512xf32, #tpu.memory_space<vmem>>, %arg3: memref<4x512xf32, #tpu.memory_space<vmem>>, %arg4: memref<4x1xf32, #tpu.memory_space<vmem>>, %arg5: memref<1xf32, #tpu.memory_space<smem>>, %arg6: memref<1x8x128xf32, #tpu.memory_space<vmem>>, %arg7: memref<4x128xf32, #tpu.memory_space<vmem>>) attributes {dimension_semantics = [#tpu.dimension_semantics<parallel>, #tpu.dimension_semantics<arbitrary>], iteration_bounds = array<i64: 1, 1>, scalar_prefetch = 0 : i64, scratch_operands = 1 : i64, tpu.core_type = #tpu.core_type<tc>, window_params = [{transform_indices = @transform_0, window_bounds = array<i64: 4, 512>}, {transform_indices = @transform_1, window_bounds = array<i64: 4, 512>}, {transform_indices = @transform_2, window_bounds = array<i64: 4, 1>}, {transform_indices = @transform_3, window_bounds = array<i64: 1>}, {transform_indices = @transform_4, window_bounds = array<i64: 1, 8, 128>}]} {
    %c0_i32 = arith.constant 0 : i32
    %0 = arith.cmpi eq, %arg1, %c0_i32 : i32
    %1 = arith.extui %0 : i1 to i32
    %c0_i32_0 = arith.constant 0 : i32
    %2 = arith.cmpi ne, %1, %c0_i32_0 : i32
    scf.if %2 {
      %cst = arith.constant 0.000000e+00 : f32
      %30 = vector.broadcast %cst : f32 to vector<4x128xf32>
      %c0_10 = arith.constant 0 : index
      %c0_11 = arith.constant 0 : index
      %31 = vector.load %arg7[%c0_10, %c0_11] : memref<4x128xf32, #tpu.memory_space<vmem>>, vector<4x128xf32>
      tpu.vector_store %arg7[%c0_10, %c0_11], %30 {strides = array<i32>} : memref<4x128xf32, #tpu.memory_space<vmem>>, vector<4x128xf32>,
    } else {
    }
    %c0 = arith.constant 0 : index
    %c0_1 = arith.constant 0 : index
    %3 = vector.load %arg2[%c0, %c0_1] : memref<4x512xf32, #tpu.memory_space<vmem>>, vector<4x512xf32>
    %c0_2 = arith.constant 0 : index
    %c0_3 = arith.constant 0 : index
    %4 = vector.load %arg3[%c0_2, %c0_3] : memref<4x512xf32, #tpu.memory_space<vmem>>, vector<4x512xf32>
    %c0_4 = arith.constant 0 : index
    %c0_5 = arith.constant 0 : index
    %5 = vector.load %arg7[%c0_4, %c0_5] : memref<4x128xf32, #tpu.memory_space<vmem>>, vector<4x128xf32>
    %6 = vector.extract_strided_slice %3 {offsets = [0, 0], sizes = [4, 128], strides = [1, 1]} : vector<4x512xf32> to vector<4x128xf32>
    %7 = vector.extract_strided_slice %4 {offsets = [0, 0], sizes = [4, 128], strides = [1, 1]} : vector<4x512xf32> to vector<4x128xf32>
    %8 = arith.subf %6, %7 : vector<4x128xf32>
    %9 = arith.mulf %8, %8 : vector<4x128xf32>
    %10 = arith.addf %5, %9 : vector<4x128xf32>
    %11 = vector.extract_strided_slice %3 {offsets = [0, 128], sizes = [4, 128], strides = [1, 1]} : vector<4x512xf32> to vector<4x128xf32>
    %12 = vector.extract_strided_slice %4 {offsets = [0, 128], sizes = [4, 128], strides = [1, 1]} : vector<4x512xf32> to vector<4x128xf32>
    %13 = arith.subf %11, %12 : vector<4x128xf32>
    %14 = arith.mulf %13, %13 : vector<4x128xf32>
    %15 = arith.addf %10, %14 : vector<4x128xf32>
    %16 = vector.extract_strided_slice %3 {offsets = [0, 256], sizes = [4, 128], strides = [1, 1]} : vector<4x512xf32> to vector<4x128xf32>
    %17 = vector.extract_strided_slice %4 {offsets = [0, 256], sizes = [4, 128], strides = [1, 1]} : vector<4x512xf32> to vector<4x128xf32>
    %18 = arith.subf %16, %17 : vector<4x128xf32>
    %19 = arith.mulf %18, %18 : vector<4x128xf32>
    %20 = arith.addf %15, %19 : vector<4x128xf32>
    %21 = vector.extract_strided_slice %3 {offsets = [0, 384], sizes = [4, 128], strides = [1, 1]} : vector<4x512xf32> to vector<4x128xf32>
    %22 = vector.extract_strided_slice %4 {offsets = [0, 384], sizes = [4, 128], strides = [1, 1]} : vector<4x512xf32> to vector<4x128xf32>
    %23 = arith.subf %21, %22 : vector<4x128xf32>
    %24 = arith.mulf %23, %23 : vector<4x128xf32>
    %25 = arith.addf %20, %24 : vector<4x128xf32>
    %c0_6 = arith.constant 0 : index
    %c0_7 = arith.constant 0 : index
    %26 = vector.load %arg7[%c0_6, %c0_7] : memref<4x128xf32, #tpu.memory_space<vmem>>, vector<4x128xf32>
    tpu.vector_store %arg7[%c0_6, %c0_7], %25 {strides = array<i32>} : memref<4x128xf32, #tpu.memory_space<vmem>>, vector<4x128xf32>,
    %c0_i32_8 = arith.constant 0 : i32
    %27 = arith.cmpi eq, %arg1, %c0_i32_8 : i32
    %28 = arith.extui %27 : i1 to i32
    %c0_i32_9 = arith.constant 0 : i32
    %29 = arith.cmpi ne, %28, %c0_i32_9 : i32
    scf.if %29 {
      %c0_10 = arith.constant 0 : index
      %c0_11 = arith.constant 0 : index
      %30 = vector.load %arg7[%c0_10, %c0_11] : memref<4x128xf32, #tpu.memory_space<vmem>>, vector<4x128xf32>
      %cst = arith.constant dense<0.000000e+00> : vector<4xf32>
      %31 = vector.multi_reduction <add>, %30, %cst [1] : vector<4x128xf32> to vector<4xf32>
      %32 = vector.shape_cast %31 : vector<4xf32> to vector<4x1xf32>
      %33 = math.sqrt %32 : vector<4x1xf32>
      %c0_12 = arith.constant 0 : index
      %c0_13 = arith.constant 0 : index
      %34 = vector.load %arg4[%c0_12, %c0_13] : memref<4x1xf32, #tpu.memory_space<vmem>>, vector<4x1xf32>
      %c0_14 = arith.constant 0 : index
      %35 = memref.load %arg5[%c0_14] : memref<1xf32, #tpu.memory_space<smem>>
      %36 = arith.mulf %34, %33 : vector<4x1xf32>
      %cst_15 = arith.constant 1.000000e+00 : f32
      %37 = vector.broadcast %cst_15 : f32 to vector<4x1xf32>
      %38 = arith.subf %37, %34 : vector<4x1xf32>
      %39 = vector.broadcast %35 : f32 to vector<4x1xf32>
      %40 = arith.subf %39, %33 : vector<4x1xf32>
      %cst_16 = arith.constant 0.000000e+00 : f32
      %41 = vector.broadcast %cst_16 : f32 to vector<4x1xf32>
      %42 = arith.maximumf %40, %41 : vector<4x1xf32>
      %43 = arith.mulf %38, %42 : vector<4x1xf32>
      %44 = arith.addf %36, %43 : vector<4x1xf32>
      %45 = vector.shape_cast %44 : vector<4x1xf32> to vector<1x4x1xf32>
      %cst_17 = arith.constant dense<0.000000e+00> : vector<1xf32>
      %46 = vector.multi_reduction <add>, %45, %cst_17 [1, 2] : vector<1x4x1xf32> to vector<1xf32>
      %47 = vector.shape_cast %46 : vector<1xf32> to vector<1x1x1xf32>
      %48 = vector.extract %47[0, 0, 0] : f32 from vector<1x1x1xf32>
      %49 = vector.broadcast %48 : f32 to vector<1x8x128xf32>
      %c0_18 = arith.constant 0 : index
      %c0_19 = arith.constant 0 : index
      %c0_20 = arith.constant 0 : index
      %50 = vector.load %arg6[%c0_18, %c0_19, %c0_20] : memref<1x8x128xf32, #tpu.memory_space<vmem>>, vector<1x8x128xf32>
      tpu.vector_store %arg6[%c0_18, %c0_19, %c0_20], %49 {strides = array<i32>} : memref<1x8x128xf32, #tpu.memory_space<vmem>>, vector<1x8x128xf32>,
    } else {
    }
    return
  }
  func.func @transform_0(%arg0: i32, %arg1: i32) -> (i32, i32) {
    %c0_i32 = arith.constant 0 : i32
    return %arg0, %arg1 : i32, i32
  }
  func.func @transform_1(%arg0: i32, %arg1: i32) -> (i32, i32) {
    %c0_i32 = arith.constant 0 : i32
    return %arg0, %arg1 : i32, i32
  }
  func.func @transform_2(%arg0: i32, %arg1: i32) -> (i32, i32) {
    %c0_i32 = arith.constant 0 : i32
    %c0_i32_0 = arith.constant 0 : i32
    return %arg0, %c0_i32 : i32, i32
  }
  func.func @transform_3(%arg0: i32, %arg1: i32) -> i32 {
    %c0_i32 = arith.constant 0 : i32
    %c0_i32_0 = arith.constant 0 : i32
    return %c0_i32 : i32
  }
  func.func @transform_4(%arg0: i32, %arg1: i32) -> (i32, i32, i32) {
    %c0_i32 = arith.constant 0 : i32
    %c0_i32_0 = arith.constant 0 : i32
    %c0_i32_1 = arith.constant 0 : i32
    return %arg0, %c0_i32, %c0_i32_0 : i32, i32, i32
  }
}

</mosaic_0001>

<llo_original>
// kernel: tpu_custom_call.1
$region0: #{tpu_custom_call.1}
  #allocation0 [shape = 'u32[]', space=smem, size = 0x4, offset = 0x4, fixed_abs, tag = 'smem constant byte address 0x4 - core index']
  #allocation1 [shape = 'u32[144,128]{1,0:T(1,128)}', space=vmem, size = 0x12000, scoped, tag = 'internal scratch']
  #allocation2 [shape = 'f32[4,128]{1,0:T(4,128)}', space=vmem, size = 0x800, scoped, tag = 'scratch operand']
  #allocation3 [shape = 'f32[1]{0:T(128)S(6)}', space=smem, size = 0x200, scoped, tag = 'scoped memory for tpu_custom_call.1']
  %s0 = inlined_call_operand.hbm [shape: f32[4,512], index: 0, kind: input, shape index: {}]
  %s1 = inlined_call_operand.hbm [shape: f32[4,512], index: 1, kind: input, shape index: {}]
  %s2 = inlined_call_operand.vmem [shape: f32[4,1], index: 2, kind: input, shape index: {}]
  %s3 = inlined_call_operand.<no memory space> [shape: f32[1], index: 3, kind: input, shape index: {}]
  %s4 = inlined_call_operand.hbm [shape: f32[1,8,128], index: 4, kind: output, shape index: {}]
  %s5 = sld [smem:[#allocation0]]
  $region42: #{tpu_custom_call.1} parent=0
    _
  %s7 = ssub.s32 1, %s5
  %s8 = scalar_select 0, %s7, %s5
  %9 = sst [smem:[#allocation3]] %s3
  $region1: #{tpu_custom_call.1} parent=0
    #allocation4 [shape = 'u8[8192]{0}', space=vmem, size = 0x2000, scoped, tag = 'input window, operand 0, single buffered']
    #allocation5 [shape = 's32[1]{0}', space=sflag, size = 0x4, scoped, tag = 'scoped memory for tpu_custom_call.1']
    #allocation6 [shape = 's32[1]{0}', space=sflag, size = 0x4, scoped, tag = 'scoped memory for tpu_custom_call.1']
    #allocation7 [shape = 'u8[8192]{0}', space=vmem, size = 0x2000, scoped, tag = 'input window, operand 1, single buffered']
    #allocation8 [shape = 's32[1]{0}', space=sflag, size = 0x4, scoped, tag = 'scoped memory for tpu_custom_call.1']
    #allocation9 [shape = 'u8[4096]{0}', space=vmem, size = 0x1000, scoped, tag = 'output window, operand 0, single buffered']
    %10 = vsyncpa [#allocation5], 0
    %11 = vsyncpa [#allocation8], 0
    %12 = vsyncpa [#allocation6], 0
    // Predicated region
    $region2: #{tpu_custom_call.1} parent=1 // pred_check
      _
    $region3: #{tpu_custom_call.1} parent=1 // pred_check_branch
      %14 = sbr.rel (0) target = $region5
    $region4: #{tpu_custom_call.1} parent=1 // pred_region
      %s16 = ssub.s32 256, 256
      %17 = vsyncadd [#allocation5], %s16
      %s19 = sshll.u32 [#allocation4], 4
      %s20 = int_to_ptr.vmem [resolvable:$true] %s19
      %22 = dma.hbm_to_vmem [thread:$0]  %s0, 256, %s20, [#allocation5]
    $region5: #{tpu_custom_call.1} parent=1 // pred_fallthru
      _
    // Predicated region
    $region6: #{tpu_custom_call.1} parent=1 // pred_check
      _
    $region7: #{tpu_custom_call.1} parent=1 // pred_check_branch
      %24 = sbr.rel (0) target = $region9
    $region8: #{tpu_custom_call.1} parent=1 // pred_region
      %s26 = ssub.s32 256, 256
      %27 = vsyncadd [#allocation8], %s26
      %s29 = sshll.u32 [#allocation7], 4
      %s30 = int_to_ptr.vmem [resolvable:$true] %s29
      %32 = dma.hbm_to_vmem [thread:$0]  %s1, 256, %s30, [#allocation8]
    $region9: #{tpu_custom_call.1} parent=1 // pred_fallthru
      _
    // Predicated region
    $region10: #{tpu_custom_call.1} parent=1 // pred_check
      _
    $region11: #{tpu_custom_call.1} parent=1 // pred_check_branch
      %34 = sbr.rel (0) target = $region13
    $region12: #{tpu_custom_call.1} parent=1 // pred_region
      _
    $region13: #{tpu_custom_call.1} parent=1 // pred_fallthru
      _
    // Predicated region
    $region14: #{tpu_custom_call.1} parent=1 // pred_check
      _
    $region15: #{tpu_custom_call.1} parent=1 // pred_check_branch
      %36 = sbr.rel (0) target = $region17
    $region16: #{tpu_custom_call.1} parent=1 // pred_region
      _
    $region17: #{tpu_custom_call.1} parent=1 // pred_fallthru
      _
    // Predicated region
    $region18: #{tpu_custom_call.1} parent=1 // pred_check
      _
    $region19: #{tpu_custom_call.1} parent=1 // pred_check_branch
      %38 = sbr.rel (0) target = $region21
    $region20: #{tpu_custom_call.1} parent=1 // pred_region
      %39 = dma.done [#allocation5], 256
    $region21: #{tpu_custom_call.1} parent=1 // pred_fallthru
      _
    // Predicated region
    $region22: #{tpu_custom_call.1} parent=1 // pred_check
      _
    $region23: #{tpu_custom_call.1} parent=1 // pred_check_branch
      %41 = sbr.rel (0) target = $region25
    $region24: #{tpu_custom_call.1} parent=1 // pred_region
      %42 = dma.done [#allocation8], 256
    $region25: #{tpu_custom_call.1} parent=1 // pred_fallthru
      _
    %p43 = scmp.eq.s32.totalorder 0, 0
    // Predicated region
    $region26: #{tpu_custom_call.1} parent=1 // pred_check
      %p44 = pneg %p43
    $region27: #{tpu_custom_call.1} parent=1 // pred_check_branch
      %46 = sbr.rel (%p44) target = $region29
    $region28: #{tpu_custom_call.1} parent=1 // pred_region
      %47 = vst [vmem:[#allocation2] sm:$0xf] 0.0
    $region29: #{tpu_custom_call.1} parent=1 // pred_fallthru
      _
    %v48 = vld [vmem:[#allocation4] sm:$0xff]
    %v49 = vld [vmem:[#allocation4 + $0x8] sm:$0xff]
    %v50 = vld [vmem:[#allocation7] sm:$0xff]
    %v51 = vld [vmem:[#allocation7 + $0x8] sm:$0xff]
    %v52 = vld [vmem:[#allocation2] sm:$0xf]
    %v53 = vsub.f32 %v48, %v50
    %v54 = vmul.f32 %v53, %v53
    %v55 = vadd.f32 %v52, %v54
    %v57 = vrot.slane %v48, 4
    %v60 = vrot.slane %v50, 4
    %v62 = vsub.f32 %v57, %v60
    %v63 = vmul.f32 %v62, %v62
    %v64 = vadd.f32 %v55, %v63
    %v65 = vsub.f32 %v49, %v51
    %v66 = vmul.f32 %v65, %v65
    %v67 = vadd.f32 %v64, %v66
    %v69 = vrot.slane %v49, 4
    %v72 = vrot.slane %v51, 4
    %v74 = vsub.f32 %v69, %v72
    %v75 = vmul.f32 %v74, %v74
    %v76 = vadd.f32 %v67, %v75
    %77 = vst [vmem:[#allocation2] sm:$0xf] %v76
    // Predicated region
    $region30: #{tpu_custom_call.1} parent=1 // pred_check
      %p78 = pneg %p43
    $region31: #{tpu_custom_call.1} parent=1 // pred_check_branch
      %80 = sbr.rel (%p78) target = $region33
    $region32: #{tpu_custom_call.1} parent=1 // pred_region
      %v81 = vld [vmem:[#allocation2] sm:$0xf]
      %vm82 = vcmask 1043456
      %v83 = vsel %vm82, %v81, 0.0
      %84 = vadd.xlane.f32.xlu0 %v83
      %v85 = vpop.xlane.xlu0 %84
      %v86 = vrsqrt.pop %v85
      %v87 = vmul.f32 %v85, %v86
      %vm88 = vcmp.eq.f32.partialorder %v85, inf
      %v89 = vsel %vm88, %v85, %v87
      %vm90 = vcmp.eq.f32.partialorder %v85, 0.0
      %v91 = vand.u32 %v85, 2147483648
      %v92 = vsel %vm90, %v91, %v89
      %v93 = vld [vmem:[%s2] sm:$0xf]
      %s94 = sld [smem:[#allocation3]]
      %v95 = vmul.f32 %v93, %v92
      %v96 = vsub.f32 1.0, %v93
      %v97 = vstv %s94
      %v98 = vsub.f32 %v97, %v92
      %v99 = vmax.f32 %v98, 0.0
      %v100 = vmul.f32 %v96, %v99
      %v101 = vadd.f32 %v95, %v100
      %vm102 = vcmask 3072
      %v103 = vsel %vm102, %v101, 0.0
      %104 = vadd.xlane.f32.xlu0 %v103
      %v105 = vpop.xlane.xlu0 %104
      %v106 = vrot.slane %v105, 4
      %v107 = vadd.f32 %v105, %v106
      %v108 = vrot.slane %v107, 2
      %v109 = vadd.f32 %v107, %v108
      %v110 = vrot.slane %v109, 1
      %v111 = vadd.f32 %v109, %v110
      %s112 = vtos %v111
      %v113 = vstv %s112
      %114 = vst [vmem:[#allocation9] sm:$0xff] %v113
    $region33: #{tpu_custom_call.1} parent=1 // pred_fallthru
      _
    // Predicated region
    $region34: #{tpu_custom_call.1} parent=1 // pred_check
      _
    $region35: #{tpu_custom_call.1} parent=1 // pred_check_branch
      %116 = sbr.rel (0) target = $region37
    $region36: #{tpu_custom_call.1} parent=1 // pred_region
      %s118 = ssub.s32 128, 128
      %119 = vsyncadd [#allocation6], %s118
      %s121 = sshll.u32 [#allocation9], 4
      %s122 = int_to_ptr.vmem [resolvable:$true] %s121
      %124 = dma.vmem_to_hbm [thread:$0]  %s122, 128, %s4, [#allocation6]
    $region37: #{tpu_custom_call.1} parent=1 // pred_fallthru
      _
    // Predicated region
    $region38: #{tpu_custom_call.1} parent=1 // pred_check
      _
    $region39: #{tpu_custom_call.1} parent=1 // pred_check_branch
      %126 = sbr.rel (0) target = $region41
    $region40: #{tpu_custom_call.1} parent=1 // pred_region
      %127 = dma.done [#allocation6], 128
    $region41: #{tpu_custom_call.1} parent=1 // pred_fallthru
      _
    %128 = vsyncpa [#allocation5], 1
    %129 = vsyncpa [#allocation8], 1
    %130 = vsyncpa [#allocation6], 1

</llo_original>
